<compile_context>
chip_gen: v5e
topology: v5e:2x2
jax: 0.10.0
libtpu: 0.0.40
codegen_flags: <defaults>
</compile_context>

<pallas_src>
import jax
import jax.numpy as jnp
from jax.experimental import pallas as pl
from jax.experimental.pallas import tpu as pltpu


def _round_up(n, m):
    return ((n + m - 1) // m) * m


def policy_mlp_kernel(x_ref, w1_ref, b1_ref, w2_ref, b2_ref, o_ref, h_ref):
    # x_ref:  (tm, input_size)          operand dtype (f32 or bf16)
    # w1_ref: (input_size, hidden_p)    pre-transposed, lane-padded, resident
    # b1_ref: (1, hidden_p)             f32
    # w2_ref: (hidden_p, tn)            pre-transposed, lane-padded N tile
    # b2_ref: (1, tn)                   f32
    # o_ref:  (tm, tn)                  lane-dense output tile
    # h_ref:  (tm, hidden_p) f32 scratch holding ReLU(x @ w1 + b1)

    # fc1 + bias + ReLU: compute once per row tile (first N tile), cache in VMEM.
    @pl.when(pl.program_id(1) == 0)
    def _():
        h = jnp.dot(x_ref[...], w1_ref[...],
                    preferred_element_type=jnp.float32) + b1_ref[...]
        h_ref[...] = jnp.maximum(h, 0.0)

    # fc2 + bias for this output-column tile; single cast at the store.
    out = jnp.dot(h_ref[...].astype(w2_ref.dtype), w2_ref[...],
                  preferred_element_type=jnp.float32) + b2_ref[...]
    o_ref[...] = out.astype(o_ref.dtype)


def prepare_params(w1, b1, w2, b2, *, compute_dtype=jnp.float32):
    """One-time parameter preparation (hoisted out of the forward path).

    w1: (input_size, hidden_size)   (already transposed vs. PyTorch layout)
    b1: (hidden_size,)
    w2: (hidden_size, output_size)  (already transposed vs. PyTorch layout)
    b2: (output_size,)

    Pads hidden/output dims to multiples of 128 (lane-aligned, zero padding is
    mathematically neutral) and casts weights to compute_dtype (use
    jnp.bfloat16 on v6e/v7x to feed the bf16-native MXU; biases stay f32 so
    the epilogue is f32 everywhere, including v5e).
    """
    input_size, hidden_size = w1.shape
    output_size = w2.shape[1]
    hidden_p = _round_up(hidden_size, 128)
    out_p = _round_up(output_size, 128)

    w1_p = jnp.zeros((input_size, hidden_p), compute_dtype)
    w1_p = w1_p.at[:, :hidden_size].set(w1.astype(compute_dtype))
    b1_p = jnp.zeros((1, hidden_p), jnp.float32).at[0, :hidden_size].set(
        b1.astype(jnp.float32))
    w2_p = jnp.zeros((hidden_p, out_p), compute_dtype)
    w2_p = w2_p.at[:hidden_size, :output_size].set(w2.astype(compute_dtype))
    b2_p = jnp.zeros((1, out_p), jnp.float32).at[0, :output_size].set(
        b2.astype(jnp.float32))
    return w1_p, b1_p, w2_p, b2_p


def policy_model_forward(x, params, *, output_size, max_tm=256, max_tn=1024):
    """Fused fc1 -> ReLU -> fc2 using pre-padded params from prepare_params()."""
    w1_p, b1_p, w2_p, b2_p = params
    B, input_size = x.shape
    hidden_p = w1_p.shape[1]
    out_p = w2_p.shape[1]
    cdt = w1_p.dtype

    # Row tile: whole (sublane-padded) batch in one grid step when it is small
    # enough; otherwise max_tm-row tiles (256 default keeps the per-step
    # working set inside v7x's 64 MiB VMEM).
    B_p = _round_up(B, 8)
    if B_p <= max_tm:
        tm = B_p
    else:
        tm = max_tm
        B_p = _round_up(B, tm)

    x_p = x.astype(cdt)
    if B_p != B:
        x_p = jnp.zeros((B_p, input_size), cdt).at[:B].set(x_p)

    # Output-column tile: a multiple of 128 that divides out_p, so very large
    # output layers do not require all of w2 resident in VMEM.
    if out_p <= max_tn:
        tn = out_p
    else:
        tn = (max_tn // 128) * 128
        while out_p % tn:
            tn -= 128

    grid = (B_p // tm, out_p // tn)

    # Explicit scoped-VMEM budget: double-buffered x/out/w2 tiles + resident
    # w1/biases + f32 h scratch, with ~25% headroom (pessimistic so the
    # single-buffer fallback below is also covered).
    w_item = jnp.dtype(cdt).itemsize
    o_item = jnp.dtype(x.dtype).itemsize
    vmem_need = (
        2 * tm * max(input_size, 128) * w_item   # x tile
        + 2 * input_size * hidden_p * w_item     # w1
        + 2 * 8 * hidden_p * 4                   # b1 (sublane-padded)
        + 2 * hidden_p * tn * w_item             # w2 tile
        + 2 * 8 * tn * 4                         # b2 tile
        + 2 * tm * tn * o_item                   # out tile
        + tm * hidden_p * 4                      # h scratch (f32)
    )
    vmem_limit = int(vmem_need * 1.25) + (1 << 20)
    vmem_limit = min(max(vmem_limit, 32 * 1024 * 1024), 128 * 1024 * 1024)

    flops = 2 * B_p * input_size * hidden_p + 2 * B_p * hidden_p * out_p
    bytes_accessed = (
        x_p.size * w_item + w1_p.size * w_item + w2_p.size * w_item
        + b1_p.size * 4 + b2_p.size * 4 + B_p * out_p * o_item
    )
    cost = pl.CostEstimate(flops=flops, transcendentals=0,
                           bytes_accessed=bytes_accessed)

    def build(single_buffer_resident):
        # Constant-index operands only need one VMEM buffer.
        resident = (
            dict(pipeline_mode=pl.Buffered(1)) if single_buffer_resident else {}
        )
        # w2/b2 vary with j when the N axis is tiled -> keep default
        # double-buffering there so the DMA is hidden.
        w2_kw = resident if grid[1] == 1 else {}
        return pl.pallas_call(
            policy_mlp_kernel,
            out_shape=jax.ShapeDtypeStruct((B_p, out_p), x.dtype),
            grid_spec=pltpu.PrefetchScalarGridSpec(
                num_scalar_prefetch=0,
                grid=grid,
                in_specs=[
                    pl.BlockSpec((tm, input_size), lambda i, j: (i, 0)),
                    pl.BlockSpec((input_size, hidden_p), lambda i, j: (0, 0),
                                 **resident),
                    pl.BlockSpec((1, hidden_p), lambda i, j: (0, 0), **resident),
                    pl.BlockSpec((hidden_p, tn), lambda i, j: (0, j), **w2_kw),
                    pl.BlockSpec((1, tn), lambda i, j: (0, j), **w2_kw),
                ],
                out_specs=pl.BlockSpec((tm, tn), lambda i, j: (i, j)),
                scratch_shapes=[pltpu.VMEM((tm, hidden_p), jnp.float32)],
            ),
            compiler_params=pltpu.CompilerParams(
                # Row tiles are independent -> "parallel" (uses both v7x TCs,
                # harmless on single-TC chips).  The N axis reuses the h
                # scratch, so it must stay "arbitrary".
                dimension_semantics=("parallel", "arbitrary"),
                vmem_limit_bytes=vmem_limit,
            ),
            cost_estimate=cost,
        )

    try:
        out = build(True)(x_p, w1_p, b1_p, w2_p, b2_p)
    except Exception:
        # Fallback for JAX builds that reject single-buffered pipeline_mode.
        out = build(False)(x_p, w1_p, b1_p, w2_p, b2_p)

    if B_p == B and out_p == output_size:
        return out
    return out[:B, :output_size]


def init_params(key, input_size, hidden_size, output_size):
    """Deterministic PyTorch-style uniform(-1/sqrt(fan_in), 1/sqrt(fan_in)) init."""
    k1, k2, k3, k4 = jax.random.split(key, 4)
    bound1 = 1.0 / jnp.sqrt(input_size)
    bound2 = 1.0 / jnp.sqrt(hidden_size)
    # Stored already transposed to (in_features, out_features).
    w1 = jax.random.uniform(k1, (input_size, hidden_size), jnp.float32, -bound1, bound1)
    b1 = jax.random.uniform(k2, (hidden_size,), jnp.float32, -bound1, bound1)
    w2 = jax.random.uniform(k3, (hidden_size, output_size), jnp.float32, -bound2, bound2)
    b2 = jax.random.uniform(k4, (output_size,), jnp.float32, -bound2, bound2)
    return w1, b1, w2, b2


if __name__ == "__main__":
    # Small shapes consistent with the module: batch=16, input=32, hidden=64, output=16.
    batch, input_size, hidden_size, output_size = 16, 32, 64, 16

    key = jax.random.PRNGKey(0)
    kx, kp = jax.random.split(key)
    x = jax.random.normal(kx, (batch, input_size), jnp.float32)
    w1, b1, w2, b2 = init_params(kp, input_size, hidden_size, output_size)

    # One-time parameter preparation (padding hoisted out of the forward path).
    # Use compute_dtype=jnp.bfloat16 on v6e/v7x for MXU-native operands; the
    # demo keeps f32 so the reference check is tight.
    params = prepare_params(w1, b1, w2, b2, compute_dtype=jnp.float32)

    out = policy_model_forward(x, params, output_size=output_size)
    out = jax.block_until_ready(out)

    # Reference check in plain JAX (same math as the PyTorch forward).
    ref = jnp.maximum(x @ w1 + b1, 0.0) @ w2 + b2
    assert out.shape == (batch, output_size)
    assert jnp.allclose(out, ref, atol=1e-5, rtol=1e-5), "mismatch vs reference"

    print("KERNEL_OK")
</pallas_src>

<mosaic_0001>
module attributes {stable_mosaic.version = 11 : i64} {
  func.func @policy_mlp_kernel(%arg0: i32, %arg1: i32, %arg2: memref<16x32xf32, #tpu.memory_space<vmem>>, %arg3: memref<32x128xf32, #tpu.memory_space<vmem>>, %arg4: memref<1x128xf32, #tpu.memory_space<vmem>>, %arg5: memref<128x128xf32, #tpu.memory_space<vmem>>, %arg6: memref<1x128xf32, #tpu.memory_space<vmem>>, %arg7: memref<16x128xf32, #tpu.memory_space<vmem>>, %arg8: memref<16x128xf32, #tpu.memory_space<vmem>>) attributes {dimension_semantics = [#tpu.dimension_semantics<parallel>, #tpu.dimension_semantics<arbitrary>], iteration_bounds = array<i64: 1, 1>, scalar_prefetch = 0 : i64, scratch_operands = 1 : i64, tpu.core_type = #tpu.core_type<tc>, window_params = [{transform_indices = @transform_0, window_bounds = array<i64: 16, 32>}, {pipeline_mode = #tpu.pipeline_mode<synchronous>, transform_indices = @transform_1, window_bounds = array<i64: 32, 128>}, {pipeline_mode = #tpu.pipeline_mode<synchronous>, transform_indices = @transform_2, window_bounds = array<i64: 1, 128>}, {pipeline_mode = #tpu.pipeline_mode<synchronous>, transform_indices = @transform_3, window_bounds = array<i64: 128, 128>}, {pipeline_mode = #tpu.pipeline_mode<synchronous>, transform_indices = @transform_4, window_bounds = array<i64: 1, 128>}, {transform_indices = @transform_5, window_bounds = array<i64: 16, 128>}]} {
    %c0_i32 = arith.constant 0 : i32
    %0 = arith.cmpi eq, %arg1, %c0_i32 : i32
    %1 = arith.extui %0 : i1 to i32
    %c0_i32_0 = arith.constant 0 : i32
    %2 = arith.cmpi ne, %1, %c0_i32_0 : i32
    scf.if %2 {
      %c0_8 = arith.constant 0 : index
      %c0_9 = arith.constant 0 : index
      %10 = vector.load %arg2[%c0_8, %c0_9] : memref<16x32xf32, #tpu.memory_space<vmem>>, vector<16x32xf32>
      %c0_10 = arith.constant 0 : index
      %c0_11 = arith.constant 0 : index
      %11 = vector.load %arg3[%c0_10, %c0_11] : memref<32x128xf32, #tpu.memory_space<vmem>>, vector<32x128xf32>
      %cst_12 = arith.constant dense<0.000000e+00> : vector<16x128xf32>
      %12 = tpu.matmul %10, %11, %cst_12 {dimension_numbers = #tpu.dot_dimension_numbers<[1], [0], [0], [1], [0, 0, 1, 1], [], []>} : vector<16x32xf32>, vector<32x128xf32>, vector<16x128xf32> -> vector<16x128xf32>
      %c0_13 = arith.constant 0 : index
      %c0_14 = arith.constant 0 : index
      %13 = vector.load %arg4[%c0_13, %c0_14] : memref<1x128xf32, #tpu.memory_space<vmem>>, vector<1x128xf32>
      %14 = vector.broadcast %13 : vector<1x128xf32> to vector<16x128xf32>
      %15 = arith.addf %12, %14 : vector<16x128xf32>
      %cst_15 = arith.constant 0.000000e+00 : f32
      %16 = vector.broadcast %cst_15 : f32 to vector<16x128xf32>
      %17 = arith.maximumf %15, %16 : vector<16x128xf32>
      %c0_16 = arith.constant 0 : index
      %c0_17 = arith.constant 0 : index
      %18 = vector.load %arg8[%c0_16, %c0_17] : memref<16x128xf32, #tpu.memory_space<vmem>>, vector<16x128xf32>
      tpu.vector_store %arg8[%c0_16, %c0_17], %17 {strides = array<i32>} : memref<16x128xf32, #tpu.memory_space<vmem>>, vector<16x128xf32>,
    } else {
    }
    %c0 = arith.constant 0 : index
    %c0_1 = arith.constant 0 : index
    %3 = vector.load %arg8[%c0, %c0_1] : memref<16x128xf32, #tpu.memory_space<vmem>>, vector<16x128xf32>
    %c0_2 = arith.constant 0 : index
    %c0_3 = arith.constant 0 : index
    %4 = vector.load %arg5[%c0_2, %c0_3] : memref<128x128xf32, #tpu.memory_space<vmem>>, vector<128x128xf32>
    %cst = arith.constant dense<0.000000e+00> : vector<16x128xf32>
    %5 = tpu.matmul %3, %4, %cst {dimension_numbers = #tpu.dot_dimension_numbers<[1], [0], [0], [1], [0, 0, 1, 1], [], []>} : vector<16x128xf32>, vector<128x128xf32>, vector<16x128xf32> -> vector<16x128xf32>
    %c0_4 = arith.constant 0 : index
    %c0_5 = arith.constant 0 : index
    %6 = vector.load %arg6[%c0_4, %c0_5] : memref<1x128xf32, #tpu.memory_space<vmem>>, vector<1x128xf32>
    %7 = vector.broadcast %6 : vector<1x128xf32> to vector<16x128xf32>
    %8 = arith.addf %5, %7 : vector<16x128xf32>
    %c0_6 = arith.constant 0 : index
    %c0_7 = arith.constant 0 : index
    %9 = vector.load %arg7[%c0_6, %c0_7] : memref<16x128xf32, #tpu.memory_space<vmem>>, vector<16x128xf32>
    tpu.vector_store %arg7[%c0_6, %c0_7], %8 {strides = array<i32>} : memref<16x128xf32, #tpu.memory_space<vmem>>, vector<16x128xf32>,
    return
  }
  func.func @transform_0(%arg0: i32, %arg1: i32) -> (i32, i32) {
    %c0_i32 = arith.constant 0 : i32
    %c0_i32_0 = arith.constant 0 : i32
    return %arg0, %c0_i32 : i32, i32
  }
  func.func @transform_1(%arg0: i32, %arg1: i32) -> (i32, i32) {
    %c0_i32 = arith.constant 0 : i32
    %c0_i32_0 = arith.constant 0 : i32
    %c0_i32_1 = arith.constant 0 : i32
    return %c0_i32, %c0_i32_0 : i32, i32
  }
  func.func @transform_2(%arg0: i32, %arg1: i32) -> (i32, i32) {
    %c0_i32 = arith.constant 0 : i32
    %c0_i32_0 = arith.constant 0 : i32
    %c0_i32_1 = arith.constant 0 : i32
    return %c0_i32, %c0_i32_0 : i32, i32
  }
  func.func @transform_3(%arg0: i32, %arg1: i32) -> (i32, i32) {
    %c0_i32 = arith.constant 0 : i32
    %c0_i32_0 = arith.constant 0 : i32
    return %c0_i32, %arg1 : i32, i32
  }
  func.func @transform_4(%arg0: i32, %arg1: i32) -> (i32, i32) {
    %c0_i32 = arith.constant 0 : i32
    %c0_i32_0 = arith.constant 0 : i32
    return %c0_i32, %arg1 : i32, i32
  }
  func.func @transform_5(%arg0: i32, %arg1: i32) -> (i32, i32) {
    %c0_i32 = arith.constant 0 : i32
    return %arg0, %arg1 : i32, i32
  }
}

module attributes {stable_mosaic.version = 11 : i64} {
  func.func @policy_mlp_kernel(%arg0: i32, %arg1: i32, %arg2: memref<16x32xf32, #tpu.memory_space<vmem>>, %arg3: memref<32x128xf32, #tpu.memory_space<vmem>>, %arg4: memref<1x128xf32, #tpu.memory_space<vmem>>, %arg5: memref<128x128xf32, #tpu.memory_space<vmem>>, %arg6: memref<1x128xf32, #tpu.memory_space<vmem>>, %arg7: memref<16x128xf32, #tpu.memory_space<vmem>>, %arg8: memref<16x128xf32, #tpu.memory_space<vmem>>) attributes {dimension_semantics = [#tpu.dimension_semantics<parallel>, #tpu.dimension_semantics<arbitrary>], iteration_bounds = array<i64: 1, 1>, scalar_prefetch = 0 : i64, scratch_operands = 1 : i64, tpu.core_type = #tpu.core_type<tc>, window_params = [{transform_indices = @transform_0, window_bounds = array<i64: 16, 32>}, {pipeline_mode = #tpu.pipeline_mode<synchronous>, transform_indices = @transform_1, window_bounds = array<i64: 32, 128>}, {pipeline_mode = #tpu.pipeline_mode<synchronous>, transform_indices = @transform_2, window_bounds = array<i64: 1, 128>}, {transform_indices = @transform_3, window_bounds = array<i64: 128, 128>}, {transform_indices = @transform_4, window_bounds = array<i64: 1, 128>}, {transform_indices = @transform_5, window_bounds = array<i64: 16, 128>}]} {
    %c0_i32 = arith.constant 0 : i32
    %0 = arith.cmpi eq, %arg1, %c0_i32 : i32
    %1 = arith.extui %0 : i1 to i32
    %c0_i32_0 = arith.constant 0 : i32
    %2 = arith.cmpi ne, %1, %c0_i32_0 : i32
    scf.if %2 {
      %c0_8 = arith.constant 0 : index
      %c0_9 = arith.constant 0 : index
      %10 = vector.load %arg2[%c0_8, %c0_9] : memref<16x32xf32, #tpu.memory_space<vmem>>, vector<16x32xf32>
      %c0_10 = arith.constant 0 : index
      %c0_11 = arith.constant 0 : index
      %11 = vector.load %arg3[%c0_10, %c0_11] : memref<32x128xf32, #tpu.memory_space<vmem>>, vector<32x128xf32>
      %cst_12 = arith.constant dense<0.000000e+00> : vector<16x128xf32>
      %12 = tpu.matmul %10, %11, %cst_12 {dimension_numbers = #tpu.dot_dimension_numbers<[1], [0], [0], [1], [0, 0, 1, 1], [], []>} : vector<16x32xf32>, vector<32x128xf32>, vector<16x128xf32> -> vector<16x128xf32>
      %c0_13 = arith.constant 0 : index
      %c0_14 = arith.constant 0 : index
      %13 = vector.load %arg4[%c0_13, %c0_14] : memref<1x128xf32, #tpu.memory_space<vmem>>, vector<1x128xf32>
      %14 = vector.broadcast %13 : vector<1x128xf32> to vector<16x128xf32>
      %15 = arith.addf %12, %14 : vector<16x128xf32>
      %cst_15 = arith.constant 0.000000e+00 : f32
      %16 = vector.broadcast %cst_15 : f32 to vector<16x128xf32>
      %17 = arith.maximumf %15, %16 : vector<16x128xf32>
      %c0_16 = arith.constant 0 : index
      %c0_17 = arith.constant 0 : index
      %18 = vector.load %arg8[%c0_16, %c0_17] : memref<16x128xf32, #tpu.memory_space<vmem>>, vector<16x128xf32>
      tpu.vector_store %arg8[%c0_16, %c0_17], %17 {strides = array<i32>} : memref<16x128xf32, #tpu.memory_space<vmem>>, vector<16x128xf32>,
    } else {
    }
    %c0 = arith.constant 0 : index
    %c0_1 = arith.constant 0 : index
    %3 = vector.load %arg8[%c0, %c0_1] : memref<16x128xf32, #tpu.memory_space<vmem>>, vector<16x128xf32>
    %c0_2 = arith.constant 0 : index
    %c0_3 = arith.constant 0 : index
    %4 = vector.load %arg5[%c0_2, %c0_3] : memref<128x128xf32, #tpu.memory_space<vmem>>, vector<128x128xf32>
    %cst = arith.constant dense<0.000000e+00> : vector<16x128xf32>
    %5 = tpu.matmul %3, %4, %cst {dimension_numbers = #tpu.dot_dimension_numbers<[1], [0], [0], [1], [0, 0, 1, 1], [], []>} : vector<16x128xf32>, vector<128x128xf32>, vector<16x128xf32> -> vector<16x128xf32>
    %c0_4 = arith.constant 0 : index
    %c0_5 = arith.constant 0 : index
    %6 = vector.load %arg6[%c0_4, %c0_5] : memref<1x128xf32, #tpu.memory_space<vmem>>, vector<1x128xf32>
    %7 = vector.broadcast %6 : vector<1x128xf32> to vector<16x128xf32>
    %8 = arith.addf %5, %7 : vector<16x128xf32>
    %c0_6 = arith.constant 0 : index
    %c0_7 = arith.constant 0 : index
    %9 = vector.load %arg7[%c0_6, %c0_7] : memref<16x128xf32, #tpu.memory_space<vmem>>, vector<16x128xf32>
    tpu.vector_store %arg7[%c0_6, %c0_7], %8 {strides = array<i32>} : memref<16x128xf32, #tpu.memory_space<vmem>>, vector<16x128xf32>,
    return
  }
  func.func @transform_0(%arg0: i32, %arg1: i32) -> (i32, i32) {
    %c0_i32 = arith.constant 0 : i32
    %c0_i32_0 = arith.constant 0 : i32
    return %arg0, %c0_i32 : i32, i32
  }
  func.func @transform_1(%arg0: i32, %arg1: i32) -> (i32, i32) {
    %c0_i32 = arith.constant 0 : i32
    %c0_i32_0 = arith.constant 0 : i32
    %c0_i32_1 = arith.constant 0 : i32
    return %c0_i32, %c0_i32_0 : i32, i32
  }
  func.func @transform_2(%arg0: i32, %arg1: i32) -> (i32, i32) {
    %c0_i32 = arith.constant 0 : i32
    %c0_i32_0 = arith.constant 0 : i32
    %c0_i32_1 = arith.constant 0 : i32
    return %c0_i32, %c0_i32_0 : i32, i32
  }
  func.func @transform_3(%arg0: i32, %arg1: i32) -> (i32, i32) {
    %c0_i32 = arith.constant 0 : i32
    %c0_i32_0 = arith.constant 0 : i32
    return %c0_i32, %arg1 : i32, i32
  }
  func.func @transform_4(%arg0: i32, %arg1: i32) -> (i32, i32) {
    %c0_i32 = arith.constant 0 : i32
    %c0_i32_0 = arith.constant 0 : i32
    return %c0_i32, %arg1 : i32, i32
  }
  func.func @transform_5(%arg0: i32, %arg1: i32) -> (i32, i32) {
    %c0_i32 = arith.constant 0 : i32
    return %arg0, %arg1 : i32, i32
  }
}

</mosaic_0001>

<llo_original>
// kernel: tpu_custom_call.1
$region0: #{tpu_custom_call.1}
  #allocation0 [shape = 'u32[]', space=smem, size = 0x4, offset = 0x4, fixed_abs, tag = 'smem constant byte address 0x4 - core index']
  #allocation1 [shape = 'u32[72,128]{1,0:T(1,128)}', space=vmem, size = 0x9000, scoped, tag = 'internal scratch']
  #allocation2 [shape = 'f32[16,128]{1,0:T(8,128)}', space=vmem, size = 0x2000, scoped, tag = 'scratch operand']
  %s0 = inlined_call_operand.hbm [shape: f32[16,32], index: 0, kind: input, shape index: {}]
  %s1 = inlined_call_operand.hbm [shape: f32[32,128], index: 1, kind: input, shape index: {}]
  %s2 = inlined_call_operand.vmem [shape: f32[1,128], index: 2, kind: input, shape index: {}]
  %s3 = inlined_call_operand.hbm [shape: f32[128,128], index: 3, kind: input, shape index: {}]
  %s4 = inlined_call_operand.vmem [shape: f32[1,128], index: 4, kind: input, shape index: {}]
  %s5 = inlined_call_operand.hbm [shape: f32[16,128], index: 5, kind: output, shape index: {}]
  %s6 = sld [smem:[#allocation0]]
  $region46: #{tpu_custom_call.1} parent=0
    _
  %s8 = ssub.s32 1, %s6
  %s9 = scalar_select 0, %s8, %s6
  $region1: #{tpu_custom_call.1} parent=0
    #allocation3 [shape = 'u8[8192]{0}', space=vmem, size = 0x2000, scoped, tag = 'input window, operand 0, single buffered']
    #allocation4 [shape = 's32[1]{0}', space=sflag, size = 0x4, scoped, tag = 'scoped memory for tpu_custom_call.1']
    #allocation5 [shape = 's32[1]{0}', space=sflag, size = 0x4, scoped, tag = 'scoped memory for tpu_custom_call.1']
    #allocation6 [shape = 'u8[16384]{0}', space=vmem, size = 0x4000, scoped, tag = 'input window, operand 1, single buffered']
    #allocation7 [shape = 's32[1]{0}', space=sflag, size = 0x4, scoped, tag = 'scoped memory for tpu_custom_call.1']
    #allocation8 [shape = 'u8[65536]{0}', space=vmem, size = 0x10000, scoped, tag = 'input window, operand 3, single buffered']
    #allocation9 [shape = 'u8[8192]{0}', space=vmem, size = 0x2000, scoped, tag = 'output window, operand 0, single buffered']
    %10 = vsyncpa [#allocation4], 0
    %11 = vsyncpa [#allocation7], 0
    %12 = vsyncpa [#allocation5], 0
    // Predicated region
    $region2: #{tpu_custom_call.1} parent=1 // pred_check
      _
    $region3: #{tpu_custom_call.1} parent=1 // pred_check_branch
      %14 = sbr.rel (0) target = $region5
    $region4: #{tpu_custom_call.1} parent=1 // pred_region
      %16 = vsyncadd [#allocation4], 0
      %s17 = sshll.u32 %s0, 4
      %s18 = int_to_ptr.hbm [resolvable:$true] %s17
      %s19 = sshll.u32 [#allocation3], 4
      %s20 = int_to_ptr.vmem [resolvable:$true] %s19
      %25 = dma.hbm_to_vmem [thread:$0]  %s18, 256, %s20, [#allocation4], 128, 128, 8
    $region5: #{tpu_custom_call.1} parent=1 // pred_fallthru
      _
    // Predicated region
    $region6: #{tpu_custom_call.1} parent=1 // pred_check
      _
    $region7: #{tpu_custom_call.1} parent=1 // pred_check_branch
      %27 = sbr.rel (0) target = $region9
    $region8: #{tpu_custom_call.1} parent=1 // pred_region
      %29 = vsyncadd [#allocation7], 0
      %s30 = sshll.u32 %s1, 4
      %s31 = int_to_ptr.hbm [resolvable:$true] %s30
      %s32 = sshll.u32 [#allocation6], 4
      %s33 = int_to_ptr.vmem [resolvable:$true] %s32
      %38 = dma.hbm_to_vmem [thread:$0]  %s31, 512, %s33, [#allocation7], 128, 128, 8
    $region9: #{tpu_custom_call.1} parent=1 // pred_fallthru
      _
    // Predicated region
    $region10: #{tpu_custom_call.1} parent=1 // pred_check
      _
    $region11: #{tpu_custom_call.1} parent=1 // pred_check_branch
      %40 = sbr.rel (0) target = $region13
    $region12: #{tpu_custom_call.1} parent=1 // pred_region
      _
    $region13: #{tpu_custom_call.1} parent=1 // pred_fallthru
      _
    // Predicated region
    $region14: #{tpu_custom_call.1} parent=1 // pred_check
      _
    $region15: #{tpu_custom_call.1} parent=1 // pred_check_branch
      %42 = sbr.rel (0) target = $region17
    $region16: #{tpu_custom_call.1} parent=1 // pred_region
      %44 = vsyncadd [#allocation7], 0
      %s45 = sshll.u32 %s3, 4
      %s46 = int_to_ptr.hbm [resolvable:$true] %s45
      %s47 = sshll.u32 [#allocation8], 4
      %s48 = int_to_ptr.vmem [resolvable:$true] %s47
      %53 = dma.hbm_to_vmem [thread:$0]  %s46, 2048, %s48, [#allocation7], 128, 128, 8
    $region17: #{tpu_custom_call.1} parent=1 // pred_fallthru
      _
    // Predicated region
    $region18: #{tpu_custom_call.1} parent=1 // pred_check
      _
    $region19: #{tpu_custom_call.1} parent=1 // pred_check_branch
      %55 = sbr.rel (0) target = $region21
    $region20: #{tpu_custom_call.1} parent=1 // pred_region
      _
    $region21: #{tpu_custom_call.1} parent=1 // pred_fallthru
      _
    // Predicated region
    $region22: #{tpu_custom_call.1} parent=1 // pred_check
      _
    $region23: #{tpu_custom_call.1} parent=1 // pred_check_branch
      %57 = sbr.rel (0) target = $region25
    $region24: #{tpu_custom_call.1} parent=1 // pred_region
      %59 = dma.done [#allocation4], 256
    $region25: #{tpu_custom_call.1} parent=1 // pred_fallthru
      _
    // Predicated region
    $region26: #{tpu_custom_call.1} parent=1 // pred_check
      _
    $region27: #{tpu_custom_call.1} parent=1 // pred_check_branch
      %61 = sbr.rel (0) target = $region29
    $region28: #{tpu_custom_call.1} parent=1 // pred_region
      %63 = dma.done [#allocation7], 512
    $region29: #{tpu_custom_call.1} parent=1 // pred_fallthru
      _
    // Predicated region
    $region30: #{tpu_custom_call.1} parent=1 // pred_check
      _
    $region31: #{tpu_custom_call.1} parent=1 // pred_check_branch
      %65 = sbr.rel (0) target = $region33
    $region32: #{tpu_custom_call.1} parent=1 // pred_region
      %67 = dma.done [#allocation7], 2048
    $region33: #{tpu_custom_call.1} parent=1 // pred_fallthru
      _
    %p68 = scmp.eq.s32.totalorder 0, 0
    // Predicated region
    $region34: #{tpu_custom_call.1} parent=1 // pred_check
      %p69 = pneg %p68
    $region35: #{tpu_custom_call.1} parent=1 // pred_check_branch
      %71 = sbr.rel (%p69) target = $region37
    $region36: #{tpu_custom_call.1} parent=1 // pred_region
      %v72 = vld [vmem:[#allocation3] sm:$0xff]
      %v73 = vld [vmem:[#allocation3 + $0x8] sm:$0xff]
      %v74 = vld [vmem:[#allocation6] sm:$0xff]
      %v75 = vld [vmem:[#allocation6 + $0x8] sm:$0xff]
      %v76 = vld [vmem:[#allocation6 + $0x10] sm:$0xff]
      %v77 = vld [vmem:[#allocation6 + $0x18] sm:$0xff]
      %v78 = vld [vmem:[%s2] sm:$0x1]
      %v80 = vperm.slane %v78, 0
      %vm82 = vcmask 261120
      %v84 = vsel %vm82, %v72, 0
      %v87 = vsel %vm82, %v73, 0
      %89 = vmatpush.msra.mxu0 0.0
      %90 = vmatpush.msra.mxu0 0.0
      %91 = vmatpush.msra.mxu0 0.0
      %92 = vmatpush.msra.mxu0 0.0
      %93 = vmatpush.msra.mxu0 0.0
      %94 = vmatpush.msra.mxu0 0.0
      %95 = vmatpush.msra.mxu0 0.0
      %96 = vmatpush.msra.mxu0 0.0
      %97 = vmatpush.msra.mxu0 0.0
      %98 = vmatpush.msra.mxu0 0.0
      %99 = vmatpush.msra.mxu0 0.0
      %100 = vmatpush.msra.mxu0 0.0
      %101 = vmatpush.msra.mxu0 %v77
      %102 = vmatpush.msra.mxu0 %v76
      %103 = vmatpush.msra.mxu0 %v75
      %104 = vmatpush.msra.mxu0 %v74
      %105 = vmatmul.f32.gmra.mxu0 %v84
      %v106 = vpop.f32.mrf.mxu0
      %v107 = vadd.f32 %v80, %v106
      %108 = vmatmul.f32.gmra.mxu0 %v87
      %v109 = vpop.f32.mrf.mxu0
      %v110 = vadd.f32 %v80, %v109
      %111 = vdwg.mxu0
      %v112 = vmax.f32 %v107, 0.0
      %v113 = vmax.f32 %v110, 0.0
      %114 = vst [vmem:[#allocation2] sm:$0xff] %v112
      %115 = vst [vmem:[#allocation2 + $0x8] sm:$0xff] %v113
    $region37: #{tpu_custom_call.1} parent=1 // pred_fallthru
      _
    %v116 = vld [vmem:[#allocation2] sm:$0xff]
    %v117 = vld [vmem:[#allocation2 + $0x8] sm:$0xff]
    %v118 = vld [vmem:[#allocation8] sm:$0xff]
    %v119 = vld [vmem:[#allocation8 + $0x8] sm:$0xff]
    %v120 = vld [vmem:[#allocation8 + $0x10] sm:$0xff]
    %v121 = vld [vmem:[#allocation8 + $0x18] sm:$0xff]
    %v122 = vld [vmem:[#allocation8 + $0x20] sm:$0xff]
    %v123 = vld [vmem:[#allocation8 + $0x28] sm:$0xff]
    %v124 = vld [vmem:[#allocation8 + $0x30] sm:$0xff]
    %v125 = vld [vmem:[#allocation8 + $0x38] sm:$0xff]
    %v126 = vld [vmem:[#allocation8 + $0x40] sm:$0xff]
    %v127 = vld [vmem:[#allocation8 + $0x48] sm:$0xff]
    %v128 = vld [vmem:[#allocation8 + $0x50] sm:$0xff]
    %v129 = vld [vmem:[#allocation8 + $0x58] sm:$0xff]
    %v130 = vld [vmem:[#allocation8 + $0x60] sm:$0xff]
    %v131 = vld [vmem:[#allocation8 + $0x68] sm:$0xff]
    %v132 = vld [vmem:[#allocation8 + $0x70] sm:$0xff]
    %v133 = vld [vmem:[#allocation8 + $0x78] sm:$0xff]
    %v134 = vld [vmem:[%s4] sm:$0x1]
    %v136 = vperm.slane %v134, 0
    %138 = vmatpush.msra.mxu0 %v133
    %139 = vmatpush.msra.mxu0 %v132
    %140 = vmatpush.msra.mxu0 %v131
    %141 = vmatpush.msra.mxu0 %v130
    %142 = vmatpush.msra.mxu0 %v129
    %143 = vmatpush.msra.mxu0 %v128
    %144 = vmatpush.msra.mxu0 %v127
    %145 = vmatpush.msra.mxu0 %v126
    %146 = vmatpush.msra.mxu0 %v125
    %147 = vmatpush.msra.mxu0 %v124
    %148 = vmatpush.msra.mxu0 %v123
    %149 = vmatpush.msra.mxu0 %v122
    %150 = vmatpush.msra.mxu0 %v121
    %151 = vmatpush.msra.mxu0 %v120
    %152 = vmatpush.msra.mxu0 %v119
    %153 = vmatpush.msra.mxu0 %v118
    %154 = vmatmul.f32.gmra.mxu0 %v116
    %v155 = vpop.f32.mrf.mxu0
    %v156 = vadd.f32 %v136, %v155
    %157 = vmatmul.f32.gmra.mxu0 %v117
    %v158 = vpop.f32.mrf.mxu0
    %v159 = vadd.f32 %v136, %v158
    %160 = vdwg.mxu0
    %161 = vst [vmem:[#allocation9] sm:$0xff] %v156
    %162 = vst [vmem:[#allocation9 + $0x8] sm:$0xff] %v159
    // Predicated region
    $region38: #{tpu_custom_call.1} parent=1 // pred_check
      _
    $region39: #{tpu_custom_call.1} parent=1 // pred_check_branch
      %164 = sbr.rel (0) target = $region41
    $region40: #{tpu_custom_call.1} parent=1 // pred_region
      %166 = vsyncadd [#allocation5], 0
      %s167 = sshll.u32 [#allocation9], 4
      %s168 = int_to_ptr.vmem [resolvable:$true] %s167
      %s169 = sshll.u32 %s5, 4
      %s170 = int_to_ptr.hbm [resolvable:$true] %s169
      %175 = dma.vmem_to_hbm [thread:$0]  %s168, 256, %s170, [#allocation5], 128, 128, 8
    $region41: #{tpu_custom_call.1} parent=1 // pred_fallthru
      _
    // Predicated region
    $region42: #{tpu_custom_call.1} parent=1 // pred_check
      _
    $region43: #{tpu_custom_call.1} parent=1 // pred_check_branch
      %177 = sbr.rel (0) target = $region45
    $region44: #{tpu_custom_call.1} parent=1 // pred_region
      %179 = dma.done [#allocation5], 256
    $region45: #{tpu_custom_call.1} parent=1 // pred_fallthru
      _
    %180 = vsyncpa [#allocation4], 1
    %181 = vsyncpa [#allocation7], 1
    %182 = vsyncpa [#allocation5], 1

// kernel: tpu_custom_call.1
$region0: #{tpu_custom_call.1}
  #allocation0 [shape = 'u32[]', space=smem, size = 0x4, offset = 0x4, fixed_abs, tag = 'smem constant byte address 0x4 - core index']
  #allocation1 [shape = 'u32[72,128]{1,0:T(1,128)}', space=vmem, size = 0x9000, scoped, tag = 'internal scratch']
  #allocation2 [shape = 'f32[16,128]{1,0:T(8,128)}', space=vmem, size = 0x2000, scoped, tag = 'scratch operand']
  %s0 = inlined_call_operand.hbm [shape: f32[16,32], index: 0, kind: input, shape index: {}]
  %s1 = inlined_call_operand.hbm [shape: f32[32,128], index: 1, kind: input, shape index: {}]
  %s2 = inlined_call_operand.vmem [shape: f32[1,128], index: 2, kind: input, shape index: {}]
  %s3 = inlined_call_operand.hbm [shape: f32[128,128], index: 3, kind: input, shape index: {}]
  %s4 = inlined_call_operand.vmem [shape: f32[1,128], index: 4, kind: input, shape index: {}]
  %s5 = inlined_call_operand.hbm [shape: f32[16,128], index: 5, kind: output, shape index: {}]
  %s6 = sld [smem:[#allocation0]]
  $region46: #{tpu_custom_call.1} parent=0
    _
  %s8 = ssub.s32 1, %s6
  %s9 = scalar_select 0, %s8, %s6
  $region1: #{tpu_custom_call.1} parent=0
    #allocation3 [shape = 'u8[8192]{0}', space=vmem, size = 0x2000, scoped, tag = 'input window, operand 0, single buffered']
    #allocation4 [shape = 's32[1]{0}', space=sflag, size = 0x4, scoped, tag = 'scoped memory for tpu_custom_call.1']
    #allocation5 [shape = 's32[1]{0}', space=sflag, size = 0x4, scoped, tag = 'scoped memory for tpu_custom_call.1']
    #allocation6 [shape = 'u8[16384]{0}', space=vmem, size = 0x4000, scoped, tag = 'input window, operand 1, single buffered']
    #allocation7 [shape = 's32[1]{0}', space=sflag, size = 0x4, scoped, tag = 'scoped memory for tpu_custom_call.1']
    #allocation8 [shape = 'u8[65536]{0}', space=vmem, size = 0x10000, scoped, tag = 'input window, operand 3, single buffered']
    #allocation9 [shape = 'u8[8192]{0}', space=vmem, size = 0x2000, scoped, tag = 'output window, operand 0, single buffered']
    %10 = vsyncpa [#allocation4], 0
    %11 = vsyncpa [#allocation7], 0
    %12 = vsyncpa [#allocation5], 0
    // Predicated region
    $region2: #{tpu_custom_call.1} parent=1 // pred_check
      _
    $region3: #{tpu_custom_call.1} parent=1 // pred_check_branch
      %14 = sbr.rel (0) target = $region5
    $region4: #{tpu_custom_call.1} parent=1 // pred_region
      %16 = vsyncadd [#allocation4], 0
      %s17 = sshll.u32 %s0, 4
      %s18 = int_to_ptr.hbm [resolvable:$true] %s17
      %s19 = sshll.u32 [#allocation3], 4
      %s20 = int_to_ptr.vmem [resolvable:$true] %s19
      %25 = dma.hbm_to_vmem [thread:$0]  %s18, 256, %s20, [#allocation4], 128, 128, 8
    $region5: #{tpu_custom_call.1} parent=1 // pred_fallthru
      _
    // Predicated region
    $region6: #{tpu_custom_call.1} parent=1 // pred_check
      _
    $region7: #{tpu_custom_call.1} parent=1 // pred_check_branch
      %27 = sbr.rel (0) target = $region9
    $region8: #{tpu_custom_call.1} parent=1 // pred_region
      %29 = vsyncadd [#allocation7], 0
      %s30 = sshll.u32 %s1, 4
      %s31 = int_to_ptr.hbm [resolvable:$true] %s30
      %s32 = sshll.u32 [#allocation6], 4
      %s33 = int_to_ptr.vmem [resolvable:$true] %s32
      %38 = dma.hbm_to_vmem [thread:$0]  %s31, 512, %s33, [#allocation7], 128, 128, 8
    $region9: #{tpu_custom_call.1} parent=1 // pred_fallthru
      _
    // Predicated region
    $region10: #{tpu_custom_call.1} parent=1 // pred_check
      _
    $region11: #{tpu_custom_call.1} parent=1 // pred_check_branch
      %40 = sbr.rel (0) target = $region13
    $region12: #{tpu_custom_call.1} parent=1 // pred_region
      _
    $region13: #{tpu_custom_call.1} parent=1 // pred_fallthru
      _
    // Predicated region
    $region14: #{tpu_custom_call.1} parent=1 // pred_check
      _
    $region15: #{tpu_custom_call.1} parent=1 // pred_check_branch
      %42 = sbr.rel (0) target = $region17
    $region16: #{tpu_custom_call.1} parent=1 // pred_region
      %44 = vsyncadd [#allocation7], 0
      %s45 = sshll.u32 %s3, 4
      %s46 = int_to_ptr.hbm [resolvable:$true] %s45
      %s47 = sshll.u32 [#allocation8], 4
      %s48 = int_to_ptr.vmem [resolvable:$true] %s47
      %53 = dma.hbm_to_vmem [thread:$0]  %s46, 2048, %s48, [#allocation7], 128, 128, 8
    $region17: #{tpu_custom_call.1} parent=1 // pred_fallthru
      _
    // Predicated region
    $region18: #{tpu_custom_call.1} parent=1 // pred_check
      _
    $region19: #{tpu_custom_call.1} parent=1 // pred_check_branch
      %55 = sbr.rel (0) target = $region21
    $region20: #{tpu_custom_call.1} parent=1 // pred_region
      _
    $region21: #{tpu_custom_call.1} parent=1 // pred_fallthru
      _
    // Predicated region
    $region22: #{tpu_custom_call.1} parent=1 // pred_check
      _
    $region23: #{tpu_custom_call.1} parent=1 // pred_check_branch
      %57 = sbr.rel (0) target = $region25
    $region24: #{tpu_custom_call.1} parent=1 // pred_region
      %59 = dma.done [#allocation4], 256
    $region25: #{tpu_custom_call.1} parent=1 // pred_fallthru
      _
    // Predicated region
    $region26: #{tpu_custom_call.1} parent=1 // pred_check
      _
    $region27: #{tpu_custom_call.1} parent=1 // pred_check_branch
      %61 = sbr.rel (0) target = $region29
    $region28: #{tpu_custom_call.1} parent=1 // pred_region
      %63 = dma.done [#allocation7], 512
    $region29: #{tpu_custom_call.1} parent=1 // pred_fallthru
      _
    // Predicated region
    $region30: #{tpu_custom_call.1} parent=1 // pred_check
      _
    $region31: #{tpu_custom_call.1} parent=1 // pred_check_branch
      %65 = sbr.rel (0) target = $region33
    $region32: #{tpu_custom_call.1} parent=1 // pred_region
      %67 = dma.done [#allocation7], 2048
    $region33: #{tpu_custom_call.1} parent=1 // pred_fallthru
      _
    %p68 = scmp.eq.s32.totalorder 0, 0
    // Predicated region
    $region34: #{tpu_custom_call.1} parent=1 // pred_check
      %p69 = pneg %p68
    $region35: #{tpu_custom_call.1} parent=1 // pred_check_branch
      %71 = sbr.rel (%p69) target = $region37
    $region36: #{tpu_custom_call.1} parent=1 // pred_region
      %v72 = vld [vmem:[#allocation3] sm:$0xff]
      %v73 = vld [vmem:[#allocation3 + $0x8] sm:$0xff]
      %v74 = vld [vmem:[#allocation6] sm:$0xff]
      %v75 = vld [vmem:[#allocation6 + $0x8] sm:$0xff]
      %v76 = vld [vmem:[#allocation6 + $0x10] sm:$0xff]
      %v77 = vld [vmem:[#allocation6 + $0x18] sm:$0xff]
      %v78 = vld [vmem:[%s2] sm:$0x1]
      %v80 = vperm.slane %v78, 0
      %vm82 = vcmask 261120
      %v84 = vsel %vm82, %v72, 0
      %v87 = vsel %vm82, %v73, 0
      %89 = vmatpush.msra.mxu0 0.0
      %90 = vmatpush.msra.mxu0 0.0
      %91 = vmatpush.msra.mxu0 0.0
      %92 = vmatpush.msra.mxu0 0.0
      %93 = vmatpush.msra.mxu0 0.0
      %94 = vmatpush.msra.mxu0 0.0
      %95 = vmatpush.msra.mxu0 0.0
      %96 = vmatpush.msra.mxu0 0.0
      %97 = vmatpush.msra.mxu0 0.0
      %98 = vmatpush.msra.mxu0 0.0
      %99 = vmatpush.msra.mxu0 0.0
      %100 = vmatpush.msra.mxu0 0.0
      %101 = vmatpush.msra.mxu0 %v77
      %102 = vmatpush.msra.mxu0 %v76
      %103 = vmatpush.msra.mxu0 %v75
      %104 = vmatpush.msra.mxu0 %v74
      %105 = vmatmul.f32.gmra.mxu0 %v84
      %v106 = vpop.f32.mrf.mxu0
      %v107 = vadd.f32 %v80, %v106
      %108 = vmatmul.f32.gmra.mxu0 %v87
      %v109 = vpop.f32.mrf.mxu0
      %v110 = vadd.f32 %v80, %v109
      %111 = vdwg.mxu0
      %v112 = vmax.f32 %v107, 0.0
      %v113 = vmax.f32 %v110, 0.0
      %114 = vst [vmem:[#allocation2] sm:$0xff] %v112
      %115 = vst [vmem:[#allocation2 + $0x8] sm:$0xff] %v113
    $region37: #{tpu_custom_call.1} parent=1 // pred_fallthru
      _
    %v116 = vld [vmem:[#allocation2] sm:$0xff]
    %v117 = vld [vmem:[#allocation2 + $0x8] sm:$0xff]
    %v118 = vld [vmem:[#allocation8] sm:$0xff]
    %v119 = vld [vmem:[#allocation8 + $0x8] sm:$0xff]
    %v120 = vld [vmem:[#allocation8 + $0x10] sm:$0xff]
    %v121 = vld [vmem:[#allocation8 + $0x18] sm:$0xff]
    %v122 = vld [vmem:[#allocation8 + $0x20] sm:$0xff]
    %v123 = vld [vmem:[#allocation8 + $0x28] sm:$0xff]
    %v124 = vld [vmem:[#allocation8 + $0x30] sm:$0xff]
    %v125 = vld [vmem:[#allocation8 + $0x38] sm:$0xff]
    %v126 = vld [vmem:[#allocation8 + $0x40] sm:$0xff]
    %v127 = vld [vmem:[#allocation8 + $0x48] sm:$0xff]
    %v128 = vld [vmem:[#allocation8 + $0x50] sm:$0xff]
    %v129 = vld [vmem:[#allocation8 + $0x58] sm:$0xff]
    %v130 = vld [vmem:[#allocation8 + $0x60] sm:$0xff]
    %v131 = vld [vmem:[#allocation8 + $0x68] sm:$0xff]
    %v132 = vld [vmem:[#allocation8 + $0x70] sm:$0xff]
    %v133 = vld [vmem:[#allocation8 + $0x78] sm:$0xff]
    %v134 = vld [vmem:[%s4] sm:$0x1]
    %v136 = vperm.slane %v134, 0
    %138 = vmatpush.msra.mxu0 %v133
    %139 = vmatpush.msra.mxu0 %v132
    %140 = vmatpush.msra.mxu0 %v131
    %141 = vmatpush.msra.mxu0 %v130
    %142 = vmatpush.msra.mxu0 %v129
    %143 = vmatpush.msra.mxu0 %v128
    %144 = vmatpush.msra.mxu0 %v127
    %145 = vmatpush.msra.mxu0 %v126
    %146 = vmatpush.msra.mxu0 %v125
    %147 = vmatpush.msra.mxu0 %v124
    %148 = vmatpush.msra.mxu0 %v123
    %149 = vmatpush.msra.mxu0 %v122
    %150 = vmatpush.msra.mxu0 %v121
    %151 = vmatpush.msra.mxu0 %v120
    %152 = vmatpush.msra.mxu0 %v119
    %153 = vmatpush.msra.mxu0 %v118
    %154 = vmatmul.f32.gmra.mxu0 %v116
    %v155 = vpop.f32.mrf.mxu0
    %v156 = vadd.f32 %v136, %v155
    %157 = vmatmul.f32.gmra.mxu0 %v117
    %v158 = vpop.f32.mrf.mxu0
    %v159 = vadd.f32 %v136, %v158
    %160 = vdwg.mxu0
    %161 = vst [vmem:[#allocation9] sm:$0xff] %v156
    %162 = vst [vmem:[#allocation9 + $0x8] sm:$0xff] %v159
    // Predicated region
    $region38: #{tpu_custom_call.1} parent=1 // pred_check
      _
    $region39: #{tpu_custom_call.1} parent=1 // pred_check_branch
      %164 = sbr.rel (0) target = $region41
    $region40: #{tpu_custom_call.1} parent=1 // pred_region
      %166 = vsyncadd [#allocation5], 0
      %s167 = sshll.u32 [#allocation9], 4
      %s168 = int_to_ptr.vmem [resolvable:$true] %s167
      %s169 = sshll.u32 %s5, 4
      %s170 = int_to_ptr.hbm [resolvable:$true] %s169
      %175 = dma.vmem_to_hbm [thread:$0]  %s168, 256, %s170, [#allocation5], 128, 128, 8
    $region41: #{tpu_custom_call.1} parent=1 // pred_fallthru
      _
    // Predicated region
    $region42: #{tpu_custom_call.1} parent=1 // pred_check
      _
    $region43: #{tpu_custom_call.1} parent=1 // pred_check_branch
      %177 = sbr.rel (0) target = $region45
    $region44: #{tpu_custom_call.1} parent=1 // pred_region
      %179 = dma.done [#allocation5], 256
    $region45: #{tpu_custom_call.1} parent=1 // pred_fallthru
      _
    %180 = vsyncpa [#allocation4], 1
    %181 = vsyncpa [#allocation7], 1
    %182 = vsyncpa [#allocation5], 1

</llo_original>
